<compile_context>
chip_gen: v6e
topology: v6e:2x2x1
jax: 0.10.0
libtpu: 0.0.40
codegen_flags: <defaults>
</compile_context>

<pallas_src>
import jax
import jax.numpy as jnp
from jax.experimental import pallas as pl
from jax.experimental.pallas import tpu as pltpu


def _round_up(x, m):
    return ((x + m - 1) // m) * m


# ----------------------------- Pallas kernel --------------------------------
def gmf_kernel(user_ref, item_ref, w_ref, b_ref, out_ref):
    # user_ref/item_ref: (TILE_B, D_pad) VMEM
    # w_ref:             (1, D_pad)      VMEM  (broadcast row of affine weights)
    # b_ref:             (1, 1)          SMEM  (bias scalar)
    # out_ref:           (TILE_B, 1)     VMEM
    prod = user_ref[...] * item_ref[...] * w_ref[...]          # VPU, broadcast over rows
    out_ref[...] = jnp.sum(prod, axis=-1, keepdims=True) + b_ref[0, 0]  # XLU lane reduce


def gmf_head(user_emb, item_emb, w, b, *, tile_b=1024):
    """(user_emb * item_emb) @ w + b  with batch-tiled Pallas kernel.

    user_emb, item_emb: (B, D) float32
    w:                  (D, 1) float32
    b:                  (1, 1) float32
    returns             (B, 1) float32
    """
    B, D = user_emb.shape

    # Pad feature dim to a full lane width (multiple of 128); padded W rows are
    # zero so the reduction is numerically identical.
    D_pad = _round_up(D, 128)
    if D_pad != D:
        pad = D_pad - D
        user_emb = jnp.pad(user_emb, ((0, 0), (0, pad)))
        item_emb = jnp.pad(item_emb, ((0, 0), (0, pad)))
        w = jnp.pad(w, ((0, pad), (0, 0)))
    w_row = w.reshape(1, D_pad)

    # Batch tiling: big tiles amortize per-step overhead; cap at the (sublane
    # aligned) batch so small batches still compile to a single step.
    tile_b = min(tile_b, _round_up(B, 8))
    B_pad = _round_up(B, tile_b)
    if B_pad != B:
        user_emb = jnp.pad(user_emb, ((0, B_pad - B), (0, 0)))
        item_emb = jnp.pad(item_emb, ((0, B_pad - B), (0, 0)))

    grid = (B_pad // tile_b,)

    out = pl.pallas_call(
        gmf_kernel,
        out_shape=jax.ShapeDtypeStruct((B_pad, 1), jnp.float32),
        grid_spec=pltpu.PrefetchScalarGridSpec(
            num_scalar_prefetch=0,
            grid=grid,
            in_specs=[
                pl.BlockSpec((tile_b, D_pad), lambda i: (i, 0)),        # user tile
                pl.BlockSpec((tile_b, D_pad), lambda i: (i, 0)),        # item tile
                pl.BlockSpec((1, D_pad), lambda i: (0, 0)),             # W row (resident)
                pl.BlockSpec(memory_space=pltpu.MemorySpace.SMEM),      # bias scalar
            ],
            out_specs=pl.BlockSpec((tile_b, 1), lambda i: (i, 0)),
        ),
        compiler_params=pltpu.CompilerParams(
            dimension_semantics=("parallel",),
        ),
    )(user_emb, item_emb, w_row, b)

    return out[:B]


# ------------------------------- Glue (JAX) ----------------------------------
def embed(table, idx):
    return jnp.take(table, idx, axis=0)


def gmf_forward(params, inputs):
    p, x = params, inputs

    user_parts = [
        embed(p["embedding_user"], x["user_indices"]),
        embed(p["ASnode1_info_type"], x["ASnode1_info_type"]),
        embed(p["ASnode1_AS_tier"], x["ASnode1_AS_tier"]),
        embed(p["ASnode1_info_traffic"], x["ASnode1_info_traffic"]),
        embed(p["ASnode1_info_ratio"], x["ASnode1_info_ratio"]),
        embed(p["ASnode1_info_scope"], x["ASnode1_info_scope"]),
        embed(p["ASnode1_policy_general"], x["ASnode1_policy_general"]),
        embed(p["ASnode1_policy_locations"], x["ASnode1_policy_locations"]),
        embed(p["ASnode1_policy_ratio"], x["ASnode1_policy_ratio"]),
        embed(p["ASnode1_policy_contracts"], x["ASnode1_policy_contracts"]),
        jnp.mean(embed(p["ASnode1_appearIXP"], x["ASnode1_appearIXP"]), axis=1),
        jnp.mean(embed(p["ASnode1_appearFac"], x["ASnode1_appearFac"]), axis=1),
    ]
    item_parts = [
        embed(p["embedding_item"], x["item_indices"]),
        embed(p["ASnode2_info_type"], x["ASnode2_info_type"]),
        embed(p["ASnode2_AS_tier"], x["ASnode2_AS_tier"]),
        embed(p["ASnode2_info_traffic"], x["ASnode2_info_traffic"]),
        embed(p["ASnode2_info_ratio"], x["ASnode2_info_ratio"]),
        embed(p["ASnode2_info_scope"], x["ASnode2_info_scope"]),
        embed(p["ASnode2_policy_general"], x["ASnode2_policy_general"]),
        embed(p["ASnode2_policy_locations"], x["ASnode2_policy_locations"]),
        embed(p["ASnode2_policy_ratio"], x["ASnode2_policy_ratio"]),
        embed(p["ASnode2_policy_contracts"], x["ASnode2_policy_contracts"]),
        jnp.mean(embed(p["ASnode2_appearIXP"], x["ASnode2_appearIXP"]), axis=1),
        jnp.mean(embed(p["ASnode2_appearFac"], x["ASnode2_appearFac"]), axis=1),
    ]

    user_embedding = jnp.concatenate(user_parts, axis=1)   # (B, D)
    item_embedding = jnp.concatenate(item_parts, axis=1)   # (B, D)

    # Hot path in Pallas: elementwise product + affine projection to 1 logit.
    rating = gmf_head(user_embedding, item_embedding,
                      p["affine_w"], p["affine_b"])
    # NOTE: the torch module defines self.logistic but never applies it; the
    # forward returns the raw logits, so we do the same.
    return rating, user_embedding, item_embedding


# ----------------------------- Setup / main ----------------------------------
if __name__ == "__main__":
    # Small synthetic config (ASnode1_* dims must match ASnode2_* dims so the
    # elementwise product is well-defined, exactly as the torch model implies).
    cfg = dict(
        num_users=10, num_items=12, latent_dim=8,
        num_ASnode1_info_type=3, num_ASnode2_info_type=3,
        num_ASnode1_AS_tier=4, num_ASnode2_AS_tier=4,
        num_ASnode1_info_traffic=3, num_ASnode2_info_traffic=3,
        num_ASnode1_info_ratio=3, num_ASnode2_info_ratio=3,
        num_ASnode1_info_scope=3, num_ASnode2_info_scope=3,
        num_ASnode1_policy_general=3, num_ASnode2_policy_general=3,
        num_ASnode1_policy_locations=4, num_ASnode2_policy_locations=4,
        num_ASnode1_policy_ratio=3, num_ASnode2_policy_ratio=3,
        num_ASnode1_policy_contracts=3, num_ASnode2_policy_contracts=3,
        num_ASnode1_appearIXP=6, num_ASnode2_appearIXP=6,
        num_ASnode1_appearFac=7, num_ASnode2_appearFac=7,
    )
    D_total = (cfg["latent_dim"]
               + cfg["num_ASnode1_info_type"] + cfg["num_ASnode1_AS_tier"]
               + cfg["num_ASnode1_info_traffic"] + cfg["num_ASnode1_info_ratio"]
               + cfg["num_ASnode1_info_scope"] + cfg["num_ASnode1_policy_general"]
               + cfg["num_ASnode1_policy_locations"] + cfg["num_ASnode1_policy_ratio"]
               + cfg["num_ASnode1_policy_contracts"] + 35)

    key = jax.random.PRNGKey(0)

    def nrm(k, shape):
        return (0.1 * jax.random.normal(k, shape)).astype(jnp.float32)

    # Deterministic parameter init (synthetic, not a checkpoint).
    names_dims = [
        ("embedding_user", (cfg["num_users"], cfg["latent_dim"])),
        ("ASnode1_info_type", (cfg["num_ASnode1_info_type"], cfg["num_ASnode1_info_type"])),
        ("ASnode1_AS_tier", (cfg["num_ASnode1_AS_tier"], cfg["num_ASnode1_AS_tier"])),
        ("ASnode1_info_traffic", (cfg["num_ASnode1_info_traffic"], cfg["num_ASnode1_info_traffic"])),
        ("ASnode1_info_ratio", (cfg["num_ASnode1_info_ratio"], cfg["num_ASnode1_info_ratio"])),
        ("ASnode1_info_scope", (cfg["num_ASnode1_info_scope"], cfg["num_ASnode1_info_scope"])),
        ("ASnode1_policy_general", (cfg["num_ASnode1_policy_general"], cfg["num_ASnode1_policy_general"])),
        ("ASnode1_policy_locations", (cfg["num_ASnode1_policy_locations"], cfg["num_ASnode1_policy_locations"])),
        ("ASnode1_policy_ratio", (cfg["num_ASnode1_policy_ratio"], cfg["num_ASnode1_policy_ratio"])),
        ("ASnode1_policy_contracts", (cfg["num_ASnode1_policy_contracts"], cfg["num_ASnode1_policy_contracts"])),
        ("ASnode1_appearIXP", (cfg["num_ASnode1_appearIXP"], 15)),
        ("ASnode1_appearFac", (cfg["num_ASnode1_appearFac"], 20)),
        ("embedding_item", (cfg["num_items"], cfg["latent_dim"])),
        ("ASnode2_info_type", (cfg["num_ASnode2_info_type"], cfg["num_ASnode2_info_type"])),
        ("ASnode2_AS_tier", (cfg["num_ASnode2_AS_tier"], cfg["num_ASnode2_AS_tier"])),
        ("ASnode2_info_traffic", (cfg["num_ASnode2_info_traffic"], cfg["num_ASnode2_info_traffic"])),
        ("ASnode2_info_ratio", (cfg["num_ASnode2_info_ratio"], cfg["num_ASnode2_info_ratio"])),
        ("ASnode2_info_scope", (cfg["num_ASnode2_info_scope"], cfg["num_ASnode2_info_scope"])),
        ("ASnode2_policy_general", (cfg["num_ASnode2_policy_general"], cfg["num_ASnode2_policy_general"])),
        ("ASnode2_policy_locations", (cfg["num_ASnode2_policy_locations"], cfg["num_ASnode2_policy_locations"])),
        ("ASnode2_policy_ratio", (cfg["num_ASnode2_policy_ratio"], cfg["num_ASnode2_policy_ratio"])),
        ("ASnode2_policy_contracts", (cfg["num_ASnode2_policy_contracts"], cfg["num_ASnode2_policy_contracts"])),
        ("ASnode2_appearIXP", (cfg["num_ASnode2_appearIXP"], 15)),
        ("ASnode2_appearFac", (cfg["num_ASnode2_appearFac"], 20)),
        ("affine_w", (D_total, 1)),
    ]
    keys = jax.random.split(key, len(names_dims) + 2)
    params = {name: nrm(k, shape) for (name, shape), k in zip(names_dims, keys[:-2])}
    params["affine_b"] = nrm(keys[-2], (1, 1))

    # Deterministic example inputs.
    B, L_ixp, L_fac = 8, 4, 5
    ik = jax.random.split(keys[-1], 26)

    def ridx(k, hi, shape):
        return jax.random.randint(k, shape, 0, hi, dtype=jnp.int32)

    inputs = {
        "user_indices": ridx(ik[0], cfg["num_users"], (B,)),
        "item_indices": ridx(ik[1], cfg["num_items"], (B,)),
        "ASnode1_info_type": ridx(ik[2], cfg["num_ASnode1_info_type"], (B,)),
        "ASnode1_AS_tier": ridx(ik[3], cfg["num_ASnode1_AS_tier"], (B,)),
        "ASnode1_info_traffic": ridx(ik[4], cfg["num_ASnode1_info_traffic"], (B,)),
        "ASnode1_info_ratio": ridx(ik[5], cfg["num_ASnode1_info_ratio"], (B,)),
        "ASnode1_info_scope": ridx(ik[6], cfg["num_ASnode1_info_scope"], (B,)),
        "ASnode1_policy_general": ridx(ik[7], cfg["num_ASnode1_policy_general"], (B,)),
        "ASnode1_policy_locations": ridx(ik[8], cfg["num_ASnode1_policy_locations"], (B,)),
        "ASnode1_policy_ratio": ridx(ik[9], cfg["num_ASnode1_policy_ratio"], (B,)),
        "ASnode1_policy_contracts": ridx(ik[10], cfg["num_ASnode1_policy_contracts"], (B,)),
        "ASnode1_appearIXP": ridx(ik[11], cfg["num_ASnode1_appearIXP"], (B, L_ixp)),
        "ASnode1_appearFac": ridx(ik[12], cfg["num_ASnode1_appearFac"], (B, L_fac)),
        "ASnode2_info_type": ridx(ik[13], cfg["num_ASnode2_info_type"], (B,)),
        "ASnode2_AS_tier": ridx(ik[14], cfg["num_ASnode2_AS_tier"], (B,)),
        "ASnode2_info_traffic": ridx(ik[15], cfg["num_ASnode2_info_traffic"], (B,)),
        "ASnode2_info_ratio": ridx(ik[16], cfg["num_ASnode2_info_ratio"], (B,)),
        "ASnode2_info_scope": ridx(ik[17], cfg["num_ASnode2_info_scope"], (B,)),
        "ASnode2_policy_general": ridx(ik[18], cfg["num_ASnode2_policy_general"], (B,)),
        "ASnode2_policy_locations": ridx(ik[19], cfg["num_ASnode2_policy_locations"], (B,)),
        "ASnode2_policy_ratio": ridx(ik[20], cfg["num_ASnode2_policy_ratio"], (B,)),
        "ASnode2_policy_contracts": ridx(ik[21], cfg["num_ASnode2_policy_contracts"], (B,)),
        "ASnode2_appearIXP": ridx(ik[22], cfg["num_ASnode2_appearIXP"], (B, L_ixp)),
        "ASnode2_appearFac": ridx(ik[23], cfg["num_ASnode2_appearFac"], (B, L_fac)),
    }

    rating, user_emb, item_emb = gmf_forward(params, inputs)
    rating = jax.block_until_ready(rating)

    # Pure-JAX reference for the kernel-covered hot path.
    ref = (user_emb * item_emb) @ params["affine_w"] + params["affine_b"][0, 0]
    assert rating.shape == (B, 1)
    assert jnp.allclose(rating, ref, atol=1e-5, rtol=1e-5)

    # Additional check: exercise the multi-tile grid + batch-padding path.
    B2 = 20
    ue2 = nrm(ik[24], (B2, D_total))
    ie2 = nrm(ik[25], (B2, D_total))
    out2 = gmf_head(ue2, ie2, params["affine_w"], params["affine_b"], tile_b=8)
    out2 = jax.block_until_ready(out2)
    ref2 = (ue2 * ie2) @ params["affine_w"] + params["affine_b"][0, 0]
    assert out2.shape == (B2, 1)
    assert jnp.allclose(out2, ref2, atol=1e-5, rtol=1e-5)

    print("KERNEL_OK")
</pallas_src>

<mosaic_0001>
module attributes {stable_mosaic.version = 11 : i64} {
  func.func @gmf_kernel(%arg0: i32, %arg1: memref<8x128xf32, #tpu.memory_space<vmem>>, %arg2: memref<8x128xf32, #tpu.memory_space<vmem>>, %arg3: memref<1x128xf32, #tpu.memory_space<vmem>>, %arg4: memref<1x1xf32, #tpu.memory_space<smem>>, %arg5: memref<8x1xf32, #tpu.memory_space<vmem>>) attributes {dimension_semantics = [#tpu.dimension_semantics<parallel>], iteration_bounds = array<i64: 1>, scalar_prefetch = 0 : i64, scratch_operands = 0 : i64, tpu.core_type = #tpu.core_type<tc>, window_params = [{transform_indices = @transform_0, window_bounds = array<i64: 8, 128>}, {transform_indices = @transform_1, window_bounds = array<i64: 8, 128>}, {pipeline_mode = #tpu.pipeline_mode<synchronous>, transform_indices = @transform_2, window_bounds = array<i64: 1, 128>}, {transform_indices = @transform_3, window_bounds = array<i64: 1, 1>}, {transform_indices = @transform_4, window_bounds = array<i64: 8, 1>}]} {
    %c0 = arith.constant 0 : index
    %c0_0 = arith.constant 0 : index
    %0 = vector.load %arg1[%c0, %c0_0] : memref<8x128xf32, #tpu.memory_space<vmem>>, vector<8x128xf32>
    %c0_1 = arith.constant 0 : index
    %c0_2 = arith.constant 0 : index
    %1 = vector.load %arg2[%c0_1, %c0_2] : memref<8x128xf32, #tpu.memory_space<vmem>>, vector<8x128xf32>
    %2 = arith.mulf %0, %1 : vector<8x128xf32>
    %c0_3 = arith.constant 0 : index
    %c0_4 = arith.constant 0 : index
    %3 = vector.load %arg3[%c0_3, %c0_4] : memref<1x128xf32, #tpu.memory_space<vmem>>, vector<1x128xf32>
    %4 = vector.broadcast %3 : vector<1x128xf32> to vector<8x128xf32>
    %5 = arith.mulf %2, %4 : vector<8x128xf32>
    %cst = arith.constant dense<0.000000e+00> : vector<8xf32>
    %6 = vector.multi_reduction <add>, %5, %cst [1] : vector<8x128xf32> to vector<8xf32>
    %7 = vector.shape_cast %6 : vector<8xf32> to vector<8x1xf32>
    %c0_5 = arith.constant 0 : index
    %c0_6 = arith.constant 0 : index
    %8 = memref.load %arg4[%c0_5, %c0_6] : memref<1x1xf32, #tpu.memory_space<smem>>
    %9 = vector.broadcast %8 : f32 to vector<8x1xf32>
    %10 = arith.addf %7, %9 : vector<8x1xf32>
    %c0_7 = arith.constant 0 : index
    %c0_8 = arith.constant 0 : index
    %11 = vector.load %arg5[%c0_7, %c0_8] : memref<8x1xf32, #tpu.memory_space<vmem>>, vector<8x1xf32>
    tpu.vector_store %arg5[%c0_7, %c0_8], %10 {strides = array<i32>} : memref<8x1xf32, #tpu.memory_space<vmem>>, vector<8x1xf32>,
    return
  }
  func.func @transform_0(%arg0: i32) -> (i32, i32) {
    %c0_i32 = arith.constant 0 : i32
    %c0_i32_0 = arith.constant 0 : i32
    return %arg0, %c0_i32 : i32, i32
  }
  func.func @transform_1(%arg0: i32) -> (i32, i32) {
    %c0_i32 = arith.constant 0 : i32
    %c0_i32_0 = arith.constant 0 : i32
    return %arg0, %c0_i32 : i32, i32
  }
  func.func @transform_2(%arg0: i32) -> (i32, i32) {
    %c0_i32 = arith.constant 0 : i32
    %c0_i32_0 = arith.constant 0 : i32
    %c0_i32_1 = arith.constant 0 : i32
    return %c0_i32, %c0_i32_0 : i32, i32
  }
  func.func @transform_3(%arg0: i32) -> (i32, i32) {
    %c0_i32 = arith.constant 0 : i32
    %c0_i32_0 = arith.constant 0 : i32
    %c0_i32_1 = arith.constant 0 : i32
    return %c0_i32, %c0_i32_0 : i32, i32
  }
  func.func @transform_4(%arg0: i32) -> (i32, i32) {
    %c0_i32 = arith.constant 0 : i32
    %c0_i32_0 = arith.constant 0 : i32
    return %arg0, %c0_i32 : i32, i32
  }
}

</mosaic_0001>

<llo_original>
// kernel: tpu_custom_call.1
$region0: #{tpu_custom_call.1}
  #allocation0 [shape = 'u32[]', space=smem, size = 0x4, offset = 0x4, fixed_abs, tag = 'smem constant byte address 0x4 - core index']
  #allocation1 [shape = 'u32[144,128]{1,0:T(1,128)}', space=vmem, size = 0x12000, scoped, tag = 'internal scratch']
  #allocation2 [shape = 'f32[1,1]{1,0:T(1,128)S(6)}', space=smem, size = 0x200, scoped, tag = 'scoped memory for tpu_custom_call.1']
  %s0 = inlined_call_operand.hbm [shape: f32[8,128], index: 0, kind: input, shape index: {}]
  %s1 = inlined_call_operand.hbm [shape: f32[8,128], index: 1, kind: input, shape index: {}]
  %s2 = inlined_call_operand.vmem [shape: f32[1,128], index: 2, kind: input, shape index: {}]
  %s3 = inlined_call_operand.<no memory space> [shape: f32[1,1], index: 3, kind: input, shape index: {}]
  %s4 = inlined_call_operand.vmem [shape: f32[8,1], index: 4, kind: output, shape index: {}]
  %s5 = sld [smem:[#allocation0]]
  $region34: #{tpu_custom_call.1} parent=0
    _
  %s7 = ssub.s32 1, %s5
  %s8 = scalar_select 0, %s7, %s5
  %9 = sst [smem:[#allocation2]] %s3
  $region1: #{tpu_custom_call.1} parent=0
    #allocation3 [shape = 'u8[4096]{0}', space=vmem, size = 0x1000, scoped, tag = 'input window, operand 0, single buffered']
    #allocation4 [shape = 's32[1]{0}', space=sflag, size = 0x4, scoped, tag = 'scoped memory for tpu_custom_call.1']
    #allocation5 [shape = 'u8[4096]{0}', space=vmem, size = 0x1000, scoped, tag = 'input window, operand 1, single buffered']
    #allocation6 [shape = 's32[1]{0}', space=sflag, size = 0x4, scoped, tag = 'scoped memory for tpu_custom_call.1']
    %10 = vsyncpa [#allocation4], 0
    %11 = vsyncpa [#allocation6], 0
    // Predicated region
    $region2: #{tpu_custom_call.1} parent=1 // pred_check
      _
    $region3: #{tpu_custom_call.1} parent=1 // pred_check_branch
      %13 = sbr.rel (0) target = $region5
    $region4: #{tpu_custom_call.1} parent=1 // pred_region
      %s15 = ssub.s32 128, 128
      %16 = vsyncadd [#allocation4], %s15
      %s18 = sshll.u32 [#allocation3], 4
      %s19 = int_to_ptr.vmem [resolvable:$true] %s18
      %21 = dma.hbm_to_vmem [thread:$0]  %s0, 128, %s19, [#allocation4]
    $region5: #{tpu_custom_call.1} parent=1 // pred_fallthru
      _
    // Predicated region
    $region6: #{tpu_custom_call.1} parent=1 // pred_check
      _
    $region7: #{tpu_custom_call.1} parent=1 // pred_check_branch
      %23 = sbr.rel (0) target = $region9
    $region8: #{tpu_custom_call.1} parent=1 // pred_region
      %s25 = ssub.s32 128, 128
      %26 = vsyncadd [#allocation6], %s25
      %s28 = sshll.u32 [#allocation5], 4
      %s29 = int_to_ptr.vmem [resolvable:$true] %s28
      %31 = dma.hbm_to_vmem [thread:$0]  %s1, 128, %s29, [#allocation6]
    $region9: #{tpu_custom_call.1} parent=1 // pred_fallthru
      _
    // Predicated region
    $region10: #{tpu_custom_call.1} parent=1 // pred_check
      _
    $region11: #{tpu_custom_call.1} parent=1 // pred_check_branch
      %33 = sbr.rel (0) target = $region13
    $region12: #{tpu_custom_call.1} parent=1 // pred_region
      _
    $region13: #{tpu_custom_call.1} parent=1 // pred_fallthru
      _
    // Predicated region
    $region14: #{tpu_custom_call.1} parent=1 // pred_check
      _
    $region15: #{tpu_custom_call.1} parent=1 // pred_check_branch
      %35 = sbr.rel (0) target = $region17
    $region16: #{tpu_custom_call.1} parent=1 // pred_region
      _
    $region17: #{tpu_custom_call.1} parent=1 // pred_fallthru
      _
    // Predicated region
    $region18: #{tpu_custom_call.1} parent=1 // pred_check
      _
    $region19: #{tpu_custom_call.1} parent=1 // pred_check_branch
      %37 = sbr.rel (0) target = $region21
    $region20: #{tpu_custom_call.1} parent=1 // pred_region
      %38 = dma.done [#allocation4], 128
    $region21: #{tpu_custom_call.1} parent=1 // pred_fallthru
      _
    // Predicated region
    $region22: #{tpu_custom_call.1} parent=1 // pred_check
      _
    $region23: #{tpu_custom_call.1} parent=1 // pred_check_branch
      %40 = sbr.rel (0) target = $region25
    $region24: #{tpu_custom_call.1} parent=1 // pred_region
      %41 = dma.done [#allocation6], 128
    $region25: #{tpu_custom_call.1} parent=1 // pred_fallthru
      _
    %v42 = vld [vmem:[#allocation3] sm:$0xff]
    %v43 = vld [vmem:[#allocation5] sm:$0xff]
    %v44 = vmul.f32 %v42, %v43
    %v45 = vld [vmem:[%s2] sm:$0x1]
    %v47 = vlaneseq
    %v48 = vshrl.u32 %v47, 7
    %v49 = vsub.s32 0, %v48
    %v50 = vrot.slane %v45, %v49
    %v52 = vmul.f32 %v44, %v50
    %53 = vadd.xlane.f32.xlu0 %v52
    %v54 = vpop.xlane.xlu0 %53
    %s55 = sld [smem:[#allocation2]]
    %v56 = vstv %s55
    %v57 = vadd.f32 %v54, %v56
    %vm58 = vcmask 7168
    %59 = vst.msk [vmem:[%s4] sm:$0xff] %vm58, %v57
    // Predicated region
    $region26: #{tpu_custom_call.1} parent=1 // pred_check
      _
    $region27: #{tpu_custom_call.1} parent=1 // pred_check_branch
      %61 = sbr.rel (0) target = $region29
    $region28: #{tpu_custom_call.1} parent=1 // pred_region
      _
    $region29: #{tpu_custom_call.1} parent=1 // pred_fallthru
      _
    // Predicated region
    $region30: #{tpu_custom_call.1} parent=1 // pred_check
      _
    $region31: #{tpu_custom_call.1} parent=1 // pred_check_branch
      %63 = sbr.rel (0) target = $region33
    $region32: #{tpu_custom_call.1} parent=1 // pred_region
      _
    $region33: #{tpu_custom_call.1} parent=1 // pred_fallthru
      _
    %64 = vsyncpa [#allocation4], 1
    %65 = vsyncpa [#allocation6], 1

</llo_original>
